<compile_context>
chip_gen: v5e
topology: v5e:2x2
jax: 0.10.0
libtpu: 0.0.40
codegen_flags: <defaults>
</compile_context>

<pallas_src>
import jax
import jax.numpy as jnp
from jax.experimental import pallas as pl
from jax.experimental.pallas import tpu as pltpu


# ------------------------------ Pallas kernel ------------------------------

def _fused_bottleneck_kernel(p_ref, cw_ref, cb_ref, w1_ref, b1_ref, o_ref):
    """Per-sample fused forward: conv (im2col matmul) + ReLU -> flatten -> fc1.

    p_ref  : (1, K, S)       K = C_in*kh*kw (36), S = OH*OW (64), K-major patches
    cw_ref : (C_out, K)      conv weight  (8, 36)
    cb_ref : (C_out, 1)      conv bias
    w1_ref : (C_out, S, E)   fc1 weight regrouped per conv channel (8, 64, 32)
    b1_ref : (1, E)          fc1 bias
    o_ref  : (1, 1, E)       bottleneck embedding for this sample
    """
    # Encoder conv in lane-dense layout: (C_out, K) @ (K, S) -> (C_out, S).
    conv = jnp.dot(cw_ref[...], p_ref[0], preferred_element_type=jnp.float32)
    conv = jnp.maximum(conv + cb_ref[...], 0.0)           # bias + ReLU, f32

    # fc1 on the NCHW-flattened features.  feat = conv flattened in
    # (C, OH, OW) order; computed as a sum of per-channel (1,S)@(S,E) matmuls
    # so the flatten order is exact and no cross-lane reshape is needed.
    acc = b1_ref[...].astype(jnp.float32)                 # (1, E) accumulator
    for c in range(conv.shape[0]):                        # static, unrolled (8)
        acc = acc + jnp.dot(conv[c:c + 1, :], w1_ref[c],
                            preferred_element_type=jnp.float32)
    o_ref[0] = acc.astype(o_ref.dtype)


def _fused_forward(patches, conv_w_mat, conv_b, fc1_w_r, fc1_b):
    """One pallas_call over the batch: returns (N, E) embeddings."""
    N, K, S = patches.shape
    C_out = conv_w_mat.shape[0]
    E = fc1_b.shape[1]
    out = pl.pallas_call(
        _fused_bottleneck_kernel,
        out_shape=jax.ShapeDtypeStruct((N, 1, E), patches.dtype),
        grid=(N,),
        in_specs=[
            pl.BlockSpec((1, K, S), lambda n: (n, 0, 0)),        # per-sample patches
            pl.BlockSpec((C_out, K), lambda n: (0, 0)),          # conv weight
            pl.BlockSpec((C_out, 1), lambda n: (0, 0)),          # conv bias
            pl.BlockSpec((C_out, S, E), lambda n: (0, 0, 0)),    # fc1 weight (regrouped)
            pl.BlockSpec((1, E), lambda n: (0, 0)),              # fc1 bias
        ],
        out_specs=pl.BlockSpec((1, 1, E), lambda n: (n, 0, 0)),
        compiler_params=pltpu.CompilerParams(
            dimension_semantics=("parallel",)),
    )(patches, conv_w_mat, conv_b, fc1_w_r, fc1_b)
    return out.reshape(N, E)


# ------------------------------- glue (JAX) --------------------------------

def _im2col_kmajor(x, kh, kw, stride, pad):
    """x: (N, C, H, W) -> patches (N, C*kh*kw, OH*OW), K axis in (C,kh,kw) order."""
    N, C, H, W = x.shape
    xp = jnp.pad(x, ((0, 0), (0, 0), (pad, pad), (pad, pad)))
    OH = (H + 2 * pad - kh) // stride + 1
    OW = (W + 2 * pad - kw) // stride + 1
    cols = []
    for i in range(kh):
        for j in range(kw):
            cols.append(xp[:, :, i:i + stride * OH:stride, j:j + stride * OW:stride])
    cols = jnp.stack(cols, axis=0).reshape(kh, kw, N, C, OH, OW)
    cols = cols.transpose(2, 3, 0, 1, 4, 5)               # (N, C, kh, kw, OH, OW)
    return cols.reshape(N, C * kh * kw, OH * OW), OH, OW


def init_params(c_in=4, c_mid=8, spatial=16, bottleneck_dim=32):
    """Deterministic synthetic weights (shapes implied by the hooked model)."""
    feat_dim = c_mid * (spatial // 2) * (spatial // 2)
    k = jax.random.PRNGKey(42)
    k1, k2, k3, k4 = jax.random.split(k, 4)
    return {
        "conv_w": 0.1 * jax.random.normal(k1, (c_mid, c_in, 3, 3), jnp.float32),
        "conv_b": 0.1 * jax.random.normal(k2, (c_mid,), jnp.float32),
        "fc1_w": 0.05 * jax.random.normal(k3, (bottleneck_dim, feat_dim), jnp.float32),
        "fc1_b": 0.05 * jax.random.normal(k4, (bottleneck_dim,), jnp.float32),
    }


@jax.jit
def bottleneck_embedding_extractor(x, params):
    """Equivalent of BottleneckEmbeddingExtractor.forward: returns fc1 output."""
    c_out = params["conv_w"].shape[0]
    emb_dim = params["fc1_w"].shape[0]

    # im2col (JAX glue), K-major so the conv is (C_out, K) @ (K, OH*OW).
    patches, OH, OW = _im2col_kmajor(x, 3, 3, stride=2, pad=1)
    S = OH * OW

    conv_w_mat = params["conv_w"].reshape(c_out, -1)                 # (8, 36)
    conv_b = params["conv_b"].reshape(c_out, 1)                      # (8, 1)
    # fc1 weight regrouped to (C_out, S, E): w1r[c, s, e] = fc1_w[e, c*S + s],
    # i.e. the torch.flatten(NCHW) column order, split per conv channel.
    fc1_w_r = params["fc1_w"].reshape(emb_dim, c_out, S).transpose(1, 2, 0)
    fc1_b = params["fc1_b"].reshape(1, -1)                           # (1, 32)

    # Single fused Pallas kernel: conv + ReLU + flatten + fc1, all in VMEM.
    emb = _fused_forward(patches, conv_w_mat, conv_b, fc1_w_r, fc1_b)

    # TODO(synk): the hook's .detach().cpu() host transfer and the remainder
    # of the wrapped model (rest of bottleneck / decoder) are never observed
    # by the extractor, so they are omitted.
    return emb


def _reference(x, params):
    """Pure-JAX reference (independent conv path) for correctness check."""
    conv = jax.lax.conv_general_dilated(
        x, params["conv_w"], window_strides=(2, 2), padding=((1, 1), (1, 1)),
        dimension_numbers=("NCHW", "OIHW", "NCHW"),
        precision=jax.lax.Precision.HIGHEST)
    conv = jnp.maximum(conv + params["conv_b"][None, :, None, None], 0.0)
    feat = conv.reshape(x.shape[0], -1)                   # torch.flatten on NCHW
    return (jnp.dot(feat, params["fc1_w"].T,
                    precision=jax.lax.Precision.HIGHEST)
            + params["fc1_b"])


if __name__ == "__main__":
    x = jax.random.normal(jax.random.PRNGKey(0), (2, 4, 16, 16), jnp.float32)
    params = init_params(c_in=4, c_mid=8, spatial=16, bottleneck_dim=32)

    emb = bottleneck_embedding_extractor(x, params)
    emb = jax.block_until_ready(emb)

    ref = _reference(x, params)
    assert emb.shape == (2, 32), emb.shape
    assert jnp.allclose(emb, ref, atol=1e-3, rtol=1e-3), "mismatch vs reference"

    print("KERNEL_OK")
</pallas_src>

<mosaic_0001>
module attributes {stable_mosaic.version = 11 : i64} {
  func.func @_fused_bottleneck_kernel(%arg0: i32, %arg1: memref<1x36x64xf32, #tpu.memory_space<vmem>>, %arg2: memref<8x36xf32, #tpu.memory_space<vmem>>, %arg3: memref<8x1xf32, #tpu.memory_space<vmem>>, %arg4: memref<8x64x32xf32, #tpu.memory_space<vmem>>, %arg5: memref<1x32xf32, #tpu.memory_space<vmem>>, %arg6: memref<1x1x32xf32, #tpu.memory_space<vmem>>) attributes {dimension_semantics = [#tpu.dimension_semantics<parallel>], iteration_bounds = array<i64: 2>, scalar_prefetch = 0 : i64, scratch_operands = 0 : i64, tpu.core_type = #tpu.core_type<tc>, window_params = [{transform_indices = @transform_0, window_bounds = array<i64: 1, 36, 64>}, {pipeline_mode = #tpu.pipeline_mode<synchronous>, transform_indices = @transform_1, window_bounds = array<i64: 8, 36>}, {pipeline_mode = #tpu.pipeline_mode<synchronous>, transform_indices = @transform_2, window_bounds = array<i64: 8, 1>}, {pipeline_mode = #tpu.pipeline_mode<synchronous>, transform_indices = @transform_3, window_bounds = array<i64: 8, 64, 32>}, {pipeline_mode = #tpu.pipeline_mode<synchronous>, transform_indices = @transform_4, window_bounds = array<i64: 1, 32>}, {transform_indices = @transform_5, window_bounds = array<i64: 1, 1, 32>}]} {
    %c0 = arith.constant 0 : index
    %c0_0 = arith.constant 0 : index
    %0 = vector.load %arg2[%c0, %c0_0] : memref<8x36xf32, #tpu.memory_space<vmem>>, vector<8x36xf32>
    %c0_1 = arith.constant 0 : index
    %c0_2 = arith.constant 0 : index
    %c0_3 = arith.constant 0 : index
    %1 = vector.load %arg1[%c0_1, %c0_2, %c0_3] : memref<1x36x64xf32, #tpu.memory_space<vmem>>, vector<1x36x64xf32>
    %2 = vector.shape_cast %1 : vector<1x36x64xf32> to vector<36x64xf32>
    %cst = arith.constant dense<0.000000e+00> : vector<8x64xf32>
    %3 = tpu.matmul %0, %2, %cst {dimension_numbers = #tpu.dot_dimension_numbers<[1], [0], [0], [1], [0, 0, 1, 1], [], []>} : vector<8x36xf32>, vector<36x64xf32>, vector<8x64xf32> -> vector<8x64xf32>
    %c0_4 = arith.constant 0 : index
    %c0_5 = arith.constant 0 : index
    %4 = vector.load %arg3[%c0_4, %c0_5] : memref<8x1xf32, #tpu.memory_space<vmem>>, vector<8x1xf32>
    %5 = vector.broadcast %4 : vector<8x1xf32> to vector<8x64xf32>
    %6 = arith.addf %3, %5 : vector<8x64xf32>
    %cst_6 = arith.constant 0.000000e+00 : f32
    %7 = vector.broadcast %cst_6 : f32 to vector<8x64xf32>
    %8 = arith.maximumf %6, %7 : vector<8x64xf32>
    %c0_7 = arith.constant 0 : index
    %c0_8 = arith.constant 0 : index
    %9 = vector.load %arg5[%c0_7, %c0_8] : memref<1x32xf32, #tpu.memory_space<vmem>>, vector<1x32xf32>
    %10 = vector.extract_strided_slice %8 {offsets = [0, 0], sizes = [1, 64], strides = [1, 1]} : vector<8x64xf32> to vector<1x64xf32>
    %c0_9 = arith.constant 0 : index
    %c0_10 = arith.constant 0 : index
    %c0_11 = arith.constant 0 : index
    %11 = vector.load %arg4[%c0_9, %c0_10, %c0_11] : memref<8x64x32xf32, #tpu.memory_space<vmem>>, vector<1x64x32xf32>
    %12 = vector.shape_cast %11 : vector<1x64x32xf32> to vector<64x32xf32>
    %cst_12 = arith.constant dense<0.000000e+00> : vector<1x32xf32>
    %13 = tpu.matmul %10, %12, %cst_12 {dimension_numbers = #tpu.dot_dimension_numbers<[1], [0], [0], [1], [0, 0, 1, 1], [], []>} : vector<1x64xf32>, vector<64x32xf32>, vector<1x32xf32> -> vector<1x32xf32>
    %14 = arith.addf %9, %13 : vector<1x32xf32>
    %15 = vector.extract_strided_slice %8 {offsets = [1, 0], sizes = [1, 64], strides = [1, 1]} : vector<8x64xf32> to vector<1x64xf32>
    %c1 = arith.constant 1 : index
    %c0_13 = arith.constant 0 : index
    %c0_14 = arith.constant 0 : index
    %16 = vector.load %arg4[%c1, %c0_13, %c0_14] : memref<8x64x32xf32, #tpu.memory_space<vmem>>, vector<1x64x32xf32>
    %17 = vector.shape_cast %16 : vector<1x64x32xf32> to vector<64x32xf32>
    %cst_15 = arith.constant dense<0.000000e+00> : vector<1x32xf32>
    %18 = tpu.matmul %15, %17, %cst_15 {dimension_numbers = #tpu.dot_dimension_numbers<[1], [0], [0], [1], [0, 0, 1, 1], [], []>} : vector<1x64xf32>, vector<64x32xf32>, vector<1x32xf32> -> vector<1x32xf32>
    %19 = arith.addf %14, %18 : vector<1x32xf32>
    %20 = vector.extract_strided_slice %8 {offsets = [2, 0], sizes = [1, 64], strides = [1, 1]} : vector<8x64xf32> to vector<1x64xf32>
    %c2 = arith.constant 2 : index
    %c0_16 = arith.constant 0 : index
    %c0_17 = arith.constant 0 : index
    %21 = vector.load %arg4[%c2, %c0_16, %c0_17] : memref<8x64x32xf32, #tpu.memory_space<vmem>>, vector<1x64x32xf32>
    %22 = vector.shape_cast %21 : vector<1x64x32xf32> to vector<64x32xf32>
    %cst_18 = arith.constant dense<0.000000e+00> : vector<1x32xf32>
    %23 = tpu.matmul %20, %22, %cst_18 {dimension_numbers = #tpu.dot_dimension_numbers<[1], [0], [0], [1], [0, 0, 1, 1], [], []>} : vector<1x64xf32>, vector<64x32xf32>, vector<1x32xf32> -> vector<1x32xf32>
    %24 = arith.addf %19, %23 : vector<1x32xf32>
    %25 = vector.extract_strided_slice %8 {offsets = [3, 0], sizes = [1, 64], strides = [1, 1]} : vector<8x64xf32> to vector<1x64xf32>
    %c3 = arith.constant 3 : index
    %c0_19 = arith.constant 0 : index
    %c0_20 = arith.constant 0 : index
    %26 = vector.load %arg4[%c3, %c0_19, %c0_20] : memref<8x64x32xf32, #tpu.memory_space<vmem>>, vector<1x64x32xf32>
    %27 = vector.shape_cast %26 : vector<1x64x32xf32> to vector<64x32xf32>
    %cst_21 = arith.constant dense<0.000000e+00> : vector<1x32xf32>
    %28 = tpu.matmul %25, %27, %cst_21 {dimension_numbers = #tpu.dot_dimension_numbers<[1], [0], [0], [1], [0, 0, 1, 1], [], []>} : vector<1x64xf32>, vector<64x32xf32>, vector<1x32xf32> -> vector<1x32xf32>
    %29 = arith.addf %24, %28 : vector<1x32xf32>
    %30 = vector.extract_strided_slice %8 {offsets = [4, 0], sizes = [1, 64], strides = [1, 1]} : vector<8x64xf32> to vector<1x64xf32>
    %c4 = arith.constant 4 : index
    %c0_22 = arith.constant 0 : index
    %c0_23 = arith.constant 0 : index
    %31 = vector.load %arg4[%c4, %c0_22, %c0_23] : memref<8x64x32xf32, #tpu.memory_space<vmem>>, vector<1x64x32xf32>
    %32 = vector.shape_cast %31 : vector<1x64x32xf32> to vector<64x32xf32>
    %cst_24 = arith.constant dense<0.000000e+00> : vector<1x32xf32>
    %33 = tpu.matmul %30, %32, %cst_24 {dimension_numbers = #tpu.dot_dimension_numbers<[1], [0], [0], [1], [0, 0, 1, 1], [], []>} : vector<1x64xf32>, vector<64x32xf32>, vector<1x32xf32> -> vector<1x32xf32>
    %34 = arith.addf %29, %33 : vector<1x32xf32>
    %35 = vector.extract_strided_slice %8 {offsets = [5, 0], sizes = [1, 64], strides = [1, 1]} : vector<8x64xf32> to vector<1x64xf32>
    %c5 = arith.constant 5 : index
    %c0_25 = arith.constant 0 : index
    %c0_26 = arith.constant 0 : index
    %36 = vector.load %arg4[%c5, %c0_25, %c0_26] : memref<8x64x32xf32, #tpu.memory_space<vmem>>, vector<1x64x32xf32>
    %37 = vector.shape_cast %36 : vector<1x64x32xf32> to vector<64x32xf32>
    %cst_27 = arith.constant dense<0.000000e+00> : vector<1x32xf32>
    %38 = tpu.matmul %35, %37, %cst_27 {dimension_numbers = #tpu.dot_dimension_numbers<[1], [0], [0], [1], [0, 0, 1, 1], [], []>} : vector<1x64xf32>, vector<64x32xf32>, vector<1x32xf32> -> vector<1x32xf32>
    %39 = arith.addf %34, %38 : vector<1x32xf32>
    %40 = vector.extract_strided_slice %8 {offsets = [6, 0], sizes = [1, 64], strides = [1, 1]} : vector<8x64xf32> to vector<1x64xf32>
    %c6 = arith.constant 6 : index
    %c0_28 = arith.constant 0 : index
    %c0_29 = arith.constant 0 : index
    %41 = vector.load %arg4[%c6, %c0_28, %c0_29] : memref<8x64x32xf32, #tpu.memory_space<vmem>>, vector<1x64x32xf32>
    %42 = vector.shape_cast %41 : vector<1x64x32xf32> to vector<64x32xf32>
    %cst_30 = arith.constant dense<0.000000e+00> : vector<1x32xf32>
    %43 = tpu.matmul %40, %42, %cst_30 {dimension_numbers = #tpu.dot_dimension_numbers<[1], [0], [0], [1], [0, 0, 1, 1], [], []>} : vector<1x64xf32>, vector<64x32xf32>, vector<1x32xf32> -> vector<1x32xf32>
    %44 = arith.addf %39, %43 : vector<1x32xf32>
    %45 = vector.extract_strided_slice %8 {offsets = [7, 0], sizes = [1, 64], strides = [1, 1]} : vector<8x64xf32> to vector<1x64xf32>
    %c7 = arith.constant 7 : index
    %c0_31 = arith.constant 0 : index
    %c0_32 = arith.constant 0 : index
    %46 = vector.load %arg4[%c7, %c0_31, %c0_32] : memref<8x64x32xf32, #tpu.memory_space<vmem>>, vector<1x64x32xf32>
    %47 = vector.shape_cast %46 : vector<1x64x32xf32> to vector<64x32xf32>
    %cst_33 = arith.constant dense<0.000000e+00> : vector<1x32xf32>
    %48 = tpu.matmul %45, %47, %cst_33 {dimension_numbers = #tpu.dot_dimension_numbers<[1], [0], [0], [1], [0, 0, 1, 1], [], []>} : vector<1x64xf32>, vector<64x32xf32>, vector<1x32xf32> -> vector<1x32xf32>
    %49 = arith.addf %44, %48 : vector<1x32xf32>
    %c0_34 = arith.constant 0 : index
    %c0_35 = arith.constant 0 : index
    %c0_36 = arith.constant 0 : index
    %50 = vector.load %arg6[%c0_34, %c0_35, %c0_36] : memref<1x1x32xf32, #tpu.memory_space<vmem>>, vector<1x1x32xf32>
    %51 = vector.shape_cast %50 : vector<1x1x32xf32> to vector<1x32xf32>
    %52 = vector.shape_cast %49 : vector<1x32xf32> to vector<1x1x32xf32>
    tpu.vector_store %arg6[%c0_34, %c0_35, %c0_36], %52 {strides = array<i32>} : memref<1x1x32xf32, #tpu.memory_space<vmem>>, vector<1x1x32xf32>,
    return
  }
  func.func @transform_0(%arg0: i32) -> (i32, i32, i32) {
    %c0_i32 = arith.constant 0 : i32
    %c0_i32_0 = arith.constant 0 : i32
    %c0_i32_1 = arith.constant 0 : i32
    return %arg0, %c0_i32, %c0_i32_0 : i32, i32, i32
  }
  func.func @transform_1(%arg0: i32) -> (i32, i32) {
    %c0_i32 = arith.constant 0 : i32
    %c0_i32_0 = arith.constant 0 : i32
    %c0_i32_1 = arith.constant 0 : i32
    return %c0_i32, %c0_i32_0 : i32, i32
  }
  func.func @transform_2(%arg0: i32) -> (i32, i32) {
    %c0_i32 = arith.constant 0 : i32
    %c0_i32_0 = arith.constant 0 : i32
    %c0_i32_1 = arith.constant 0 : i32
    return %c0_i32, %c0_i32_0 : i32, i32
  }
  func.func @transform_3(%arg0: i32) -> (i32, i32, i32) {
    %c0_i32 = arith.constant 0 : i32
    %c0_i32_0 = arith.constant 0 : i32
    %c0_i32_1 = arith.constant 0 : i32
    %c0_i32_2 = arith.constant 0 : i32
    return %c0_i32, %c0_i32_0, %c0_i32_1 : i32, i32, i32
  }
  func.func @transform_4(%arg0: i32) -> (i32, i32) {
    %c0_i32 = arith.constant 0 : i32
    %c0_i32_0 = arith.constant 0 : i32
    %c0_i32_1 = arith.constant 0 : i32
    return %c0_i32, %c0_i32_0 : i32, i32
  }
  func.func @transform_5(%arg0: i32) -> (i32, i32, i32) {
    %c0_i32 = arith.constant 0 : i32
    %c0_i32_0 = arith.constant 0 : i32
    %c0_i32_1 = arith.constant 0 : i32
    return %arg0, %c0_i32, %c0_i32_0 : i32, i32, i32
  }
}

</mosaic_0001>

<llo_original>
// kernel: bottleneck_embedding_extractor.1
$region0: #{bottleneck_embedding_extractor.1}
  #allocation0 [shape = 'u32[]', space=smem, size = 0x4, offset = 0x4, fixed_abs, tag = 'smem constant byte address 0x4 - core index']
  #allocation1 [shape = 'u32[72,128]{1,0:T(1,128)}', space=vmem, size = 0x9000, scoped, tag = 'internal scratch']
  %s0 = inlined_call_operand.vmem [shape: f32[2,36,64], index: 0, kind: input, shape index: {}]
  %s1 = inlined_call_operand.vmem [shape: f32[8,36], index: 1, kind: input, shape index: {}]
  %s2 = inlined_call_operand.vmem [shape: f32[8,1], index: 2, kind: input, shape index: {}]
  %s3 = inlined_call_operand.vmem [shape: f32[8,64,32], index: 3, kind: input, shape index: {}]
  %s4 = inlined_call_operand.vmem [shape: f32[1,32], index: 4, kind: input, shape index: {}]
  %s5 = inlined_call_operand.hbm [shape: f32[2,1,32], index: 5, kind: output, shape index: {}]
  %s6 = sld [smem:[#allocation0]]
  $region53: #{bottleneck_embedding_extractor.1} parent=0
    _
  %s8 = ssub.s32 1, %s6
  %s9 = scalar_select 0, %s8, %s6
  $region1: #{bottleneck_embedding_extractor.1} parent=0
    #allocation2 [shape = 'u8[1024]{0}', space=vmem, size = 0x400, scoped, tag = 'output window, operand 0']
    #allocation3 [shape = 's32[2]{0}', space=sflag, size = 0x8, scoped, tag = 'scoped memory for bottleneck_embedding_extractor.1']
    %10 = vsyncpa [#allocation3], 0
    %s11 = scalar_lea.sflag [#allocation3], 1
    %12 = vsyncpa %s11, 0
    loop: start=0, step=1, limit=4
    $region2: #{bottleneck_embedding_extractor.1} parent=1 // loop_pre_header
      _
    $region3: #{bottleneck_embedding_extractor.1} parent=1 // loop_header
      %s14 = sphi 0, %s18
      %p15 = scmp.ge.s32.totalorder %s14, 4
      %s24 = sphi 0, %s26
      %s27 = sphi 0, %s24
      %s28 = sphi 0, %s27
      %s44 = sphi 0, %s28
      %s48 = sphi 0, %s48
      %s50 = sphi 0, %s48
      %s51 = sphi 0, %s50
      %s65 = sphi 0, %s51
      %s69 = sphi 0, %s69
      %s71 = sphi 0, %s69
      %s72 = sphi 0, %s71
      %s86 = sphi 0, %s72
      %s90 = sphi 0, %s90
      %s92 = sphi 0, %s90
      %s93 = sphi 0, %s92
      %s107 = sphi 0, %s93
      %s111 = sphi 0, %s111
      %s113 = sphi 0, %s111
      %s114 = sphi 0, %s113
      %s128 = sphi 0, %s114
      %s134 = sphi 0, %s136
      %s137 = sphi 0, %s134
      %s138 = sphi 0, %s137
      %s154 = sphi 0, %s138
    $region4: #{bottleneck_embedding_extractor.1} parent=1 // loop_header_branch
      %17 = sbr.rel (%p15) target = $region8
    $region5: #{bottleneck_embedding_extractor.1} parent=1 // loop_body
      %s19 = ssub.s32 %s14, 1
      %s20 = ssub.s32 %s14, 2
      %s21 = sadd.s32 %s14, 1
      %s22 = ssub.s32 %s14, %s21
      %p23 = scmp.eq.s32.totalorder %s22, 0
      %s25 = sadd.s32 %s24, 1
      %s26 = scalar_select %p23, %s24, %s25
      %p29 = pneg %p23
      %p30 = scmp.eq.s32.totalorder %s14, 1
      %p31 = por %p29, %p30
      %p32 = scmp.ne.s32.totalorder %s24, %s27
      %p33 = scmp.eq.s32.totalorder %s14, 0
      %p34 = por %p32, %p33
      %p35 = scmp.ne.s32.totalorder %s24, %s27
      %p36 = scmp.eq.s32.totalorder %s19, 1
      %p37 = por %p35, %p36
      %p38 = scmp.ne.s32.totalorder %s27, %s28
      %p39 = scmp.eq.s32.totalorder %s19, 0
      %p40 = por %p38, %p39
      %p41 = scmp.ne.s32.totalorder %s27, %s28
      %p42 = scmp.eq.s32.totalorder %s20, 1
      %p43 = por %p41, %p42
      %p45 = scmp.ne.s32.totalorder %s28, %s44
      %p46 = scmp.eq.s32.totalorder %s20, 0
      %p47 = por %p45, %p46
      %s49 = sadd.s32 %s48, 1
      %p52 = scmp.eq.s32.totalorder %s14, 1
      %p53 = scmp.ne.s32.totalorder %s48, %s50
      %p54 = scmp.eq.s32.totalorder %s14, 0
      %p55 = por %p53, %p54
      %p56 = scmp.ne.s32.totalorder %s48, %s50
      %p57 = scmp.eq.s32.totalorder %s19, 1
      %p58 = por %p56, %p57
      %p59 = scmp.ne.s32.totalorder %s50, %s51
      %p60 = scmp.eq.s32.totalorder %s19, 0
      %p61 = por %p59, %p60
      %p62 = scmp.ne.s32.totalorder %s50, %s51
      %p63 = scmp.eq.s32.totalorder %s20, 1
      %p64 = por %p62, %p63
      %p66 = scmp.ne.s32.totalorder %s51, %s65
      %p67 = scmp.eq.s32.totalorder %s20, 0
      %p68 = por %p66, %p67
      %s70 = sadd.s32 %s69, 1
      %p73 = scmp.eq.s32.totalorder %s14, 1
      %p74 = scmp.ne.s32.totalorder %s69, %s71
      %p75 = scmp.eq.s32.totalorder %s14, 0
      %p76 = por %p74, %p75
      %p77 = scmp.ne.s32.totalorder %s69, %s71
      %p78 = scmp.eq.s32.totalorder %s19, 1
      %p79 = por %p77, %p78
      %p80 = scmp.ne.s32.totalorder %s71, %s72
      %p81 = scmp.eq.s32.totalorder %s19, 0
      %p82 = por %p80, %p81
      %p83 = scmp.ne.s32.totalorder %s71, %s72
      %p84 = scmp.eq.s32.totalorder %s20, 1
      %p85 = por %p83, %p84
      %p87 = scmp.ne.s32.totalorder %s72, %s86
      %p88 = scmp.eq.s32.totalorder %s20, 0
      %p89 = por %p87, %p88
      %s91 = sadd.s32 %s90, 1
      %p94 = scmp.eq.s32.totalorder %s14, 1
      %p95 = scmp.ne.s32.totalorder %s90, %s92
      %p96 = scmp.eq.s32.totalorder %s14, 0
      %p97 = por %p95, %p96
      %p98 = scmp.ne.s32.totalorder %s90, %s92
      %p99 = scmp.eq.s32.totalorder %s19, 1
      %p100 = por %p98, %p99
      %p101 = scmp.ne.s32.totalorder %s92, %s93
      %p102 = scmp.eq.s32.totalorder %s19, 0
      %p103 = por %p101, %p102
      %p104 = scmp.ne.s32.totalorder %s92, %s93
      %p105 = scmp.eq.s32.totalorder %s20, 1
      %p106 = por %p104, %p105
      %p108 = scmp.ne.s32.totalorder %s93, %s107
      %p109 = scmp.eq.s32.totalorder %s20, 0
      %p110 = por %p108, %p109
      %s112 = sadd.s32 %s111, 1
      %p115 = scmp.eq.s32.totalorder %s14, 1
      %p116 = scmp.ne.s32.totalorder %s111, %s113
      %p117 = scmp.eq.s32.totalorder %s14, 0
      %p118 = por %p116, %p117
      %p119 = scmp.ne.s32.totalorder %s111, %s113
      %p120 = scmp.eq.s32.totalorder %s19, 1
      %p121 = por %p119, %p120
      %p122 = scmp.ne.s32.totalorder %s113, %s114
      %p123 = scmp.eq.s32.totalorder %s19, 0
      %p124 = por %p122, %p123
      %p125 = scmp.ne.s32.totalorder %s113, %s114
      %p126 = scmp.eq.s32.totalorder %s20, 1
      %p127 = por %p125, %p126
      %p129 = scmp.ne.s32.totalorder %s114, %s128
      %p130 = scmp.eq.s32.totalorder %s20, 0
      %p131 = por %p129, %p130
      %s132 = ssub.s32 %s14, %s21
      %p133 = scmp.eq.s32.totalorder %s132, 0
      %s135 = sadd.s32 %s134, 1
      %s136 = scalar_select %p133, %s134, %s135
      %p139 = pneg %p133
      %p140 = scmp.eq.s32.totalorder %s14, 1
      %p141 = por %p139, %p140
      %p142 = scmp.ne.s32.totalorder %s134, %s137
      %p143 = scmp.eq.s32.totalorder %s14, 0
      %p144 = por %p142, %p143
      %p145 = scmp.ne.s32.totalorder %s134, %s137
      %p146 = scmp.eq.s32.totalorder %s19, 1
      %p147 = por %p145, %p146
      %p148 = scmp.ne.s32.totalorder %s137, %s138
      %p149 = scmp.eq.s32.totalorder %s19, 0
      %p150 = por %p148, %p149
      %p151 = scmp.ne.s32.totalorder %s137, %s138
      %p152 = scmp.eq.s32.totalorder %s20, 1
      %p153 = por %p151, %p152
      %p155 = scmp.ne.s32.totalorder %s138, %s154
      %p156 = scmp.eq.s32.totalorder %s20, 0
      %p157 = por %p155, %p156
      %p158 = scmp.le.s32.totalorder 1, %s14
      %p159 = scmp.lt.s32.totalorder %s14, 3
      %p160 = pnand %p158, %p159
      %p161 = pneg %p160
      // Predicated region
      $region9: #{bottleneck_embedding_extractor.1} parent=5 // pred_check
        _
      $region10: #{bottleneck_embedding_extractor.1} parent=5 // pred_check_branch
        %163 = sbr.rel (%p160) target = $region12
      $region11: #{bottleneck_embedding_extractor.1} parent=5 // pred_region
        %s164 = ssub.s32 %s14, 1
        // Predicated region
        $region13: #{bottleneck_embedding_extractor.1} parent=11 // pred_check
          %p165 = pneg %p61
        $region14: #{bottleneck_embedding_extractor.1} parent=11 // pred_check_branch
          %167 = sbr.rel (%p165) target = $region16
        $region15: #{bottleneck_embedding_extractor.1} parent=11 // pred_region
          _
        $region16: #{bottleneck_embedding_extractor.1} parent=11 // pred_fallthru
          _
        // Predicated region
        $region17: #{bottleneck_embedding_extractor.1} parent=11 // pred_check
          %p168 = pneg %p82
        $region18: #{bottleneck_embedding_extractor.1} parent=11 // pred_check_branch
          %170 = sbr.rel (%p168) target = $region20
        $region19: #{bottleneck_embedding_extractor.1} parent=11 // pred_region
          _
        $region20: #{bottleneck_embedding_extractor.1} parent=11 // pred_fallthru
          _
        // Predicated region
        $region21: #{bottleneck_embedding_extractor.1} parent=11 // pred_check
          %p171 = pneg %p103
        $region22: #{bottleneck_embedding_extractor.1} parent=11 // pred_check_branch
          %173 = sbr.rel (%p171) target = $region24
        $region23: #{bottleneck_embedding_extractor.1} parent=11 // pred_region
          _
        $region24: #{bottleneck_embedding_extractor.1} parent=11 // pred_fallthru
          _
        // Predicated region
        $region25: #{bottleneck_embedding_extractor.1} parent=11 // pred_check
          %p174 = pneg %p124
        $region26: #{bottleneck_embedding_extractor.1} parent=11 // pred_check_branch
          %176 = sbr.rel (%p174) target = $region28
        $region27: #{bottleneck_embedding_extractor.1} parent=11 // pred_region
          _
        $region28: #{bottleneck_embedding_extractor.1} parent=11 // pred_fallthru
          _
      $region12: #{bottleneck_embedding_extractor.1} parent=5 // pred_fallthru
        _
      %p177 = scmp.lt.s32.totalorder %s14, 2
      // Predicated region
      $region29: #{bottleneck_embedding_extractor.1} parent=5 // pred_check
        %p178 = pneg %p177
      $region30: #{bottleneck_embedding_extractor.1} parent=5 // pred_check_branch
        %180 = sbr.rel (%p178) target = $region32
      $region31: #{bottleneck_embedding_extractor.1} parent=5 // pred_region
        // Predicated region
        $region33: #{bottleneck_embedding_extractor.1} parent=31 // pred_check
          %p181 = pneg %p34
        $region34: #{bottleneck_embedding_extractor.1} parent=31 // pred_check_branch
          %183 = sbr.rel (%p181) target = $region36
        $region35: #{bottleneck_embedding_extractor.1} parent=31 // pred_region
          %p184 = scmp.lt.s32.totalorder %s14, 1
          %s185 = scalar_select %p184, %s14, 1
          %s186 = smul.addr %s185, 5
          %s187 = smul.addr %s186, 8
          %s188 = scalar_lea.vmem %s0, %s187
        $region36: #{bottleneck_embedding_extractor.1} parent=31 // pred_fallthru
          _
      $region32: #{bottleneck_embedding_extractor.1} parent=5 // pred_fallthru
        _
      %p189 = scmp.le.s32.totalorder 1, %s14
      %p190 = scmp.lt.s32.totalorder %s14, 3
      %p191 = pnand %p189, %p190
      %p192 = pneg %p191
      // Predicated region
      $region37: #{bottleneck_embedding_extractor.1} parent=5 // pred_check
        _
      $region38: #{bottleneck_embedding_extractor.1} parent=5 // pred_check_branch
        %194 = sbr.rel (%p191) target = $region40
      $region39: #{bottleneck_embedding_extractor.1} parent=5 // pred_region
        %s195 = ssub.s32 %s14, 1
        %p196 = scmp.lt.s32.totalorder %s19, 1
        %s197 = scalar_select %p196, %s19, 1
        %s198 = smul.addr %s197, 5
        %s199 = smul.addr %s198, 8
        %s200 = scalar_lea.vmem %s0, %s199
        %p201 = pneg %p40
        %p202 = pneg %p37
        %p203 = pneg %p61
        %p204 = pneg %p58
        %p205 = pneg %p82
        %p206 = pneg %p79
        %p207 = pneg %p103
        %p208 = pneg %p100
        %p209 = pneg %p124
        %p210 = pneg %p121
        %p211 = pneg %p150
        %p212 = pneg %p147
        %s213 = sand.u32 %s137, 1
        %s214 = scalar_lea.sflag [#allocation3], %s213
        %s215 = sand.u32 %s137, 1
        %s216 = scalar_lea.vmem [#allocation2], %s215
        %p217 = scmp.lt.s32.totalorder %s19, 1
        %s218 = scalar_select %p217, %s19, 1
        %s219 = smul.addr %s218, 5
        %s220 = smul.addr %s219, 8
        %s221 = scalar_lea.vmem %s0, %s220
        %v222 = vld [vmem:[%s1] sm:$0xff]
        %v223 = vld [vmem:[%s221] sm:$0xff]
        %v224 = vld [vmem:[%s221 + $0x8] sm:$0xff]
        %v225 = vld [vmem:[%s221 + $0x10] sm:$0xff]
        %v226 = vld [vmem:[%s221 + $0x18] sm:$0xff]
        %v227 = vld [vmem:[%s221 + $0x20] sm:$0xf]
        %v228 = vld [vmem:[%s2] sm:$0xff]
        %230 = vset.pattern.permute.xlu0 0
        %231 = vperm.xlu0 %230, %v228
        %v232 = vpop.permute.xlu0 %231
        %vm234 = vcmask 293888
        %v236 = vsel %vm234, %v222, 0
        %vm238 = vcmask 1043456
        %v240 = vsel %vm238, %v227, 0
        %242 = vmatpush.msra.mxu0 0.0
        %243 = vmatpush.msra.mxu0 0.0
        %244 = vmatpush.msra.mxu0 0.0
        %245 = vmatpush.msra.mxu0 0.0
        %246 = vmatpush.msra.mxu0 0.0
        %247 = vmatpush.msra.mxu0 0.0
        %248 = vmatpush.msra.mxu0 0.0
        %249 = vmatpush.msra.mxu0 0.0
        %250 = vmatpush.msra.mxu0 0.0
        %251 = vmatpush.msra.mxu0 0.0
        %252 = vmatpush.msra.mxu0 0.0
        %253 = vmatpush.msra.mxu0 %v240
        %254 = vmatpush.msra.mxu0 %v226
        %255 = vmatpush.msra.mxu0 %v225
        %256 = vmatpush.msra.mxu0 %v224
        %257 = vmatpush.msra.mxu0 %v223
        %258 = vmatmul.f32.gmra.mxu0 %v236
        %v259 = vpop.f32.mrf.mxu0
        %v260 = vadd.f32 %v232, %v259
        %261 = vdwg.mxu0
        %v262 = vmax.f32 %v260, 0.0
        %v263 = vld [vmem:[%s4] sm:$0x1]
        %v264 = vld [vmem:[%s3] sm:$0xff]
        %v265 = vld [vmem:[%s3 + $0x8] sm:$0xff]
        %v266 = vld [vmem:[%s3 + $0x10] sm:$0xff]
        %v267 = vld [vmem:[%s3 + $0x18] sm:$0xff]
        %v268 = vld [vmem:[%s3 + $0x20] sm:$0xff]
        %v269 = vld [vmem:[%s3 + $0x28] sm:$0xff]
        %v270 = vld [vmem:[%s3 + $0x30] sm:$0xff]
        %v271 = vld [vmem:[%s3 + $0x38] sm:$0xff]
        %vm272 = vcmask 523264
        %v274 = vsel %vm272, %v262, 0
        %276 = vmatpush.msra.mxu0 0.0
        %277 = vmatpush.msra.mxu0 0.0
        %278 = vmatpush.msra.mxu0 0.0
        %279 = vmatpush.msra.mxu0 0.0
        %280 = vmatpush.msra.mxu0 0.0
        %281 = vmatpush.msra.mxu0 0.0
        %282 = vmatpush.msra.mxu0 0.0
        %283 = vmatpush.msra.mxu0 0.0
        %284 = vmatpush.msra.mxu0 %v271
        %285 = vmatpush.msra.mxu0 %v270
        %286 = vmatpush.msra.mxu0 %v269
        %287 = vmatpush.msra.mxu0 %v268
        %288 = vmatpush.msra.mxu0 %v267
        %289 = vmatpush.msra.mxu0 %v266
        %290 = vmatpush.msra.mxu0 %v265
        %291 = vmatpush.msra.mxu0 %v264
        %292 = vmatmul.f32.gmra.mxu0 %v274
        %v293 = vpop.f32.mrf.mxu0
        %v294 = vadd.f32 0.0, %v293
        %295 = vdwg.mxu0
        %v296 = vadd.f32 %v263, %v294
        %s297 = scalar_lea.vmem %s3, 64
        %v298 = vld [vmem:[%s297] sm:$0xff]
        %v299 = vld [vmem:[%s297 + $0x8] sm:$0xff]
        %v300 = vld [vmem:[%s297 + $0x10] sm:$0xff]
        %v301 = vld [vmem:[%s297 + $0x18] sm:$0xff]
        %v302 = vld [vmem:[%s297 + $0x20] sm:$0xff]
        %v303 = vld [vmem:[%s297 + $0x28] sm:$0xff]
        %v304 = vld [vmem:[%s297 + $0x30] sm:$0xff]
        %v305 = vld [vmem:[%s297 + $0x38] sm:$0xff]
        %v306 = vrot.slane %v262, 1
        %v307 = vsel %vm272, %v306, 0
        %309 = vmatpush.msra.mxu0 0.0
        %310 = vmatpush.msra.mxu0 0.0
        %311 = vmatpush.msra.mxu0 0.0
        %312 = vmatpush.msra.mxu0 0.0
        %313 = vmatpush.msra.mxu0 0.0
        %314 = vmatpush.msra.mxu0 0.0
        %315 = vmatpush.msra.mxu0 0.0
        %316 = vmatpush.msra.mxu0 0.0
        %317 = vmatpush.msra.mxu0 %v305
        %318 = vmatpush.msra.mxu0 %v304
        %319 = vmatpush.msra.mxu0 %v303
        %320 = vmatpush.msra.mxu0 %v302
        %321 = vmatpush.msra.mxu0 %v301
        %322 = vmatpush.msra.mxu0 %v300
        %323 = vmatpush.msra.mxu0 %v299
        %324 = vmatpush.msra.mxu0 %v298
        %325 = vmatmul.f32.gmra.mxu0 %v307
        %v326 = vpop.f32.mrf.mxu0
        %v327 = vadd.f32 0.0, %v326
        %328 = vdwg.mxu0
        %v329 = vadd.f32 %v296, %v327
        %s330 = scalar_lea.vmem %s3, 128
        %v331 = vld [vmem:[%s330] sm:$0xff]
        %v332 = vld [vmem:[%s330 + $0x8] sm:$0xff]
        %v333 = vld [vmem:[%s330 + $0x10] sm:$0xff]
        %v334 = vld [vmem:[%s330 + $0x18] sm:$0xff]
        %v335 = vld [vmem:[%s330 + $0x20] sm:$0xff]
        %v336 = vld [vmem:[%s330 + $0x28] sm:$0xff]
        %v337 = vld [vmem:[%s330 + $0x30] sm:$0xff]
        %v338 = vld [vmem:[%s330 + $0x38] sm:$0xff]
        %v339 = vrot.slane %v262, 2
        %v340 = vsel %vm272, %v339, 0
        %342 = vmatpush.msra.mxu0 0.0
        %343 = vmatpush.msra.mxu0 0.0
        %344 = vmatpush.msra.mxu0 0.0
        %345 = vmatpush.msra.mxu0 0.0
        %346 = vmatpush.msra.mxu0 0.0
        %347 = vmatpush.msra.mxu0 0.0
        %348 = vmatpush.msra.mxu0 0.0
        %349 = vmatpush.msra.mxu0 0.0
        %350 = vmatpush.msra.mxu0 %v338
        %351 = vmatpush.msra.mxu0 %v337
        %352 = vmatpush.msra.mxu0 %v336
        %353 = vmatpush.msra.mxu0 %v335
        %354 = vmatpush.msra.mxu0 %v334
        %355 = vmatpush.msra.mxu0 %v333
        %356 = vmatpush.msra.mxu0 %v332
        %357 = vmatpush.msra.mxu0 %v331
        %358 = vmatmul.f32.gmra.mxu0 %v340
        %v359 = vpop.f32.mrf.mxu0
        %v360 = vadd.f32 0.0, %v359
        %361 = vdwg.mxu0
        %v362 = vadd.f32 %v329, %v360
        %s363 = scalar_lea.vmem %s3, 192
        %v364 = vld [vmem:[%s363] sm:$0xff]
        %v365 = vld [vmem:[%s363 + $0x8] sm:$0xff]
        %v366 = vld [vmem:[%s363 + $0x10] sm:$0xff]
        %v367 = vld [vmem:[%s363 + $0x18] sm:$0xff]
        %v368 = vld [vmem:[%s363 + $0x20] sm:$0xff]
        %v369 = vld [vmem:[%s363 + $0x28] sm:$0xff]
        %v370 = vld [vmem:[%s363 + $0x30] sm:$0xff]
        %v371 = vld [vmem:[%s363 + $0x38] sm:$0xff]
        %v372 = vrot.slane %v262, 3
        %v373 = vsel %vm272, %v372, 0
        %375 = vmatpush.msra.mxu0 0.0
        %376 = vmatpush.msra.mxu0 0.0
        %377 = vmatpush.msra.mxu0 0.0
        %378 = vmatpush.msra.mxu0 0.0
        %379 = vmatpush.msra.mxu0 0.0
        %380 = vmatpush.msra.mxu0 0.0
        %381 = vmatpush.msra.mxu0 0.0
        %382 = vmatpush.msra.mxu0 0.0
        %383 = vmatpush.msra.mxu0 %v371
        %384 = vmatpush.msra.mxu0 %v370
        %385 = vmatpush.msra.mxu0 %v369
        %386 = vmatpush.msra.mxu0 %v368
        %387 = vmatpush.msra.mxu0 %v367
        %388 = vmatpush.msra.mxu0 %v366
        %389 = vmatpush.msra.mxu0 %v365
        %390 = vmatpush.msra.mxu0 %v364
        %391 = vmatmul.f32.gmra.mxu0 %v373
        %v392 = vpop.f32.mrf.mxu0
        %v393 = vadd.f32 0.0, %v392
        %394 = vdwg.mxu0
        %v395 = vadd.f32 %v362, %v393
        %s396 = scalar_lea.vmem %s3, 256
        %v397 = vld [vmem:[%s396] sm:$0xff]
        %v398 = vld [vmem:[%s396 + $0x8] sm:$0xff]
        %v399 = vld [vmem:[%s396 + $0x10] sm:$0xff]
        %v400 = vld [vmem:[%s396 + $0x18] sm:$0xff]
        %v401 = vld [vmem:[%s396 + $0x20] sm:$0xff]
        %v402 = vld [vmem:[%s396 + $0x28] sm:$0xff]
        %v403 = vld [vmem:[%s396 + $0x30] sm:$0xff]
        %v404 = vld [vmem:[%s396 + $0x38] sm:$0xff]
        %v405 = vrot.slane %v262, 4
        %v406 = vsel %vm272, %v405, 0
        %408 = vmatpush.msra.mxu0 0.0
        %409 = vmatpush.msra.mxu0 0.0
        %410 = vmatpush.msra.mxu0 0.0
        %411 = vmatpush.msra.mxu0 0.0
        %412 = vmatpush.msra.mxu0 0.0
        %413 = vmatpush.msra.mxu0 0.0
        %414 = vmatpush.msra.mxu0 0.0
        %415 = vmatpush.msra.mxu0 0.0
        %416 = vmatpush.msra.mxu0 %v404
        %417 = vmatpush.msra.mxu0 %v403
        %418 = vmatpush.msra.mxu0 %v402
        %419 = vmatpush.msra.mxu0 %v401
        %420 = vmatpush.msra.mxu0 %v400
        %421 = vmatpush.msra.mxu0 %v399
        %422 = vmatpush.msra.mxu0 %v398
        %423 = vmatpush.msra.mxu0 %v397
        %424 = vmatmul.f32.gmra.mxu0 %v406
        %v425 = vpop.f32.mrf.mxu0
        %v426 = vadd.f32 0.0, %v425
        %427 = vdwg.mxu0
        %v428 = vadd.f32 %v395, %v426
        %s429 = scalar_lea.vmem %s3, 320
        %v430 = vld [vmem:[%s429] sm:$0xff]
        %v431 = vld [vmem:[%s429 + $0x8] sm:$0xff]
        %v432 = vld [vmem:[%s429 + $0x10] sm:$0xff]
        %v433 = vld [vmem:[%s429 + $0x18] sm:$0xff]
        %v434 = vld [vmem:[%s429 + $0x20] sm:$0xff]
        %v435 = vld [vmem:[%s429 + $0x28] sm:$0xff]
        %v436 = vld [vmem:[%s429 + $0x30] sm:$0xff]
        %v437 = vld [vmem:[%s429 + $0x38] sm:$0xff]
        %v438 = vrot.slane %v262, 5
        %v439 = vsel %vm272, %v438, 0
        %441 = vmatpush.msra.mxu0 0.0
        %442 = vmatpush.msra.mxu0 0.0
        %443 = vmatpush.msra.mxu0 0.0
        %444 = vmatpush.msra.mxu0 0.0
        %445 = vmatpush.msra.mxu0 0.0
        %446 = vmatpush.msra.mxu0 0.0
        %447 = vmatpush.msra.mxu0 0.0
        %448 = vmatpush.msra.mxu0 0.0
        %449 = vmatpush.msra.mxu0 %v437
        %450 = vmatpush.msra.mxu0 %v436
        %451 = vmatpush.msra.mxu0 %v435
        %452 = vmatpush.msra.mxu0 %v434
        %453 = vmatpush.msra.mxu0 %v433
        %454 = vmatpush.msra.mxu0 %v432
        %455 = vmatpush.msra.mxu0 %v431
        %456 = vmatpush.msra.mxu0 %v430
        %457 = vmatmul.f32.gmra.mxu0 %v439
        %v458 = vpop.f32.mrf.mxu0
        %v459 = vadd.f32 0.0, %v458
        %460 = vdwg.mxu0
        %v461 = vadd.f32 %v428, %v459
        %s462 = scalar_lea.vmem %s3, 384
        %v463 = vld [vmem:[%s462] sm:$0xff]
        %v464 = vld [vmem:[%s462 + $0x8] sm:$0xff]
        %v465 = vld [vmem:[%s462 + $0x10] sm:$0xff]
        %v466 = vld [vmem:[%s462 + $0x18] sm:$0xff]
        %v467 = vld [vmem:[%s462 + $0x20] sm:$0xff]
        %v468 = vld [vmem:[%s462 + $0x28] sm:$0xff]
        %v469 = vld [vmem:[%s462 + $0x30] sm:$0xff]
        %v470 = vld [vmem:[%s462 + $0x38] sm:$0xff]
        %v471 = vrot.slane %v262, 6
        %v472 = vsel %vm272, %v471, 0
        %474 = vmatpush.msra.mxu0 0.0
        %475 = vmatpush.msra.mxu0 0.0
        %476 = vmatpush.msra.mxu0 0.0
        %477 = vmatpush.msra.mxu0 0.0
        %478 = vmatpush.msra.mxu0 0.0
        %479 = vmatpush.msra.mxu0 0.0
        %480 = vmatpush.msra.mxu0 0.0
        %481 = vmatpush.msra.mxu0 0.0
        %482 = vmatpush.msra.mxu0 %v470
        %483 = vmatpush.msra.mxu0 %v469
        %484 = vmatpush.msra.mxu0 %v468
        %485 = vmatpush.msra.mxu0 %v467
        %486 = vmatpush.msra.mxu0 %v466
        %487 = vmatpush.msra.mxu0 %v465
        %488 = vmatpush.msra.mxu0 %v464
        %489 = vmatpush.msra.mxu0 %v463
        %490 = vmatmul.f32.gmra.mxu0 %v472
        %v491 = vpop.f32.mrf.mxu0
        %v492 = vadd.f32 0.0, %v491
        %493 = vdwg.mxu0
        %v494 = vadd.f32 %v461, %v492
        %s495 = scalar_lea.vmem %s3, 448
        %v496 = vld [vmem:[%s495] sm:$0xff]
        %v497 = vld [vmem:[%s495 + $0x8] sm:$0xff]
        %v498 = vld [vmem:[%s495 + $0x10] sm:$0xff]
        %v499 = vld [vmem:[%s495 + $0x18] sm:$0xff]
        %v500 = vld [vmem:[%s495 + $0x20] sm:$0xff]
        %v501 = vld [vmem:[%s495 + $0x28] sm:$0xff]
        %v502 = vld [vmem:[%s495 + $0x30] sm:$0xff]
        %v503 = vld [vmem:[%s495 + $0x38] sm:$0xff]
        %v504 = vrot.slane %v262, 7
        %v505 = vsel %vm272, %v504, 0
        %507 = vmatpush.msra.mxu0 0.0
        %508 = vmatpush.msra.mxu0 0.0
        %509 = vmatpush.msra.mxu0 0.0
        %510 = vmatpush.msra.mxu0 0.0
        %511 = vmatpush.msra.mxu0 0.0
        %512 = vmatpush.msra.mxu0 0.0
        %513 = vmatpush.msra.mxu0 0.0
        %514 = vmatpush.msra.mxu0 0.0
        %515 = vmatpush.msra.mxu0 %v503
        %516 = vmatpush.msra.mxu0 %v502
        %517 = vmatpush.msra.mxu0 %v501
        %518 = vmatpush.msra.mxu0 %v500
        %519 = vmatpush.msra.mxu0 %v499
        %520 = vmatpush.msra.mxu0 %v498
        %521 = vmatpush.msra.mxu0 %v497
        %522 = vmatpush.msra.mxu0 %v496
        %523 = vmatmul.f32.gmra.mxu0 %v505
        %v524 = vpop.f32.mrf.mxu0
        %v525 = vadd.f32 0.0, %v524
        %526 = vdwg.mxu0
        %v527 = vadd.f32 %v494, %v525
        %vm528 = vcmask 253952
        %529 = vst.msk [vmem:[%s216] sm:$0x1] %vm528, %v527
        %s530 = sand.u32 %s137, 1
        %s531 = scalar_lea.sflag [#allocation3], %s530
        %s532 = sand.u32 %s137, 1
        %s533 = scalar_lea.vmem [#allocation2], %s532
        // Predicated region
        $region41: #{bottleneck_embedding_extractor.1} parent=39 // pred_check
          %p534 = pneg %p147
        $region42: #{bottleneck_embedding_extractor.1} parent=39 // pred_check_branch
          %536 = sbr.rel (%p534) target = $region44
        $region43: #{bottleneck_embedding_extractor.1} parent=39 // pred_region
          %538 = vsyncadd %s531, 0
          %s539 = scalar_lea.hbm %s5, %s19
          %s541 = sshll.u32 %s533, 4
          %s542 = int_to_ptr.vmem [resolvable:$true] %s541
          %s543 = sshll.u32 %s539, 4
          %s544 = int_to_ptr.hbm [resolvable:$true] %s543
          %546 = dma.vmem_to_hbm [thread:$0]  %s542, 16, %s544, %s531
        $region44: #{bottleneck_embedding_extractor.1} parent=39 // pred_fallthru
          _
      $region40: #{bottleneck_embedding_extractor.1} parent=5 // pred_fallthru
        _
      %p547 = scmp.le.s32.totalorder 2, %s14
      // Predicated region
      $region45: #{bottleneck_embedding_extractor.1} parent=5 // pred_check
        %p548 = pneg %p547
      $region46: #{bottleneck_embedding_extractor.1} parent=5 // pred_check_branch
        %550 = sbr.rel (%p548) target = $region48
      $region47: #{bottleneck_embedding_extractor.1} parent=5 // pred_region
        %s551 = ssub.s32 %s14, 2
        // Predicated region
        $region49: #{bottleneck_embedding_extractor.1} parent=47 // pred_check
          %p552 = pneg %p153
        $region50: #{bottleneck_embedding_extractor.1} parent=47 // pred_check_branch
          %554 = sbr.rel (%p552) target = $region52
        $region51: #{bottleneck_embedding_extractor.1} parent=47 // pred_region
          %s555 = sand.u32 %s138, 1
          %s556 = scalar_lea.sflag [#allocation3], %s555
          %s557 = sand.u32 %s138, 1
          %s558 = scalar_lea.vmem [#allocation2], %s557
          %560 = dma.done %s556, 16
        $region52: #{bottleneck_embedding_extractor.1} parent=47 // pred_fallthru
          _
      $region48: #{bottleneck_embedding_extractor.1} parent=5 // pred_fallthru
        _
    $region6: #{bottleneck_embedding_extractor.1} parent=1 // loop_footer
      %s18 = sadd.s32 1, %s14
    $region7: #{bottleneck_embedding_extractor.1} parent=1 // loop_footer_branch
      %13 = sbr.rel target = $region3
    $region8: #{bottleneck_embedding_extractor.1} parent=1 // loop_exit
      _
    %561 = vsyncpa [#allocation3], 1
    %s562 = scalar_lea.sflag [#allocation3], 1
    %563 = vsyncpa %s562, 1

</llo_original>
